<compile_context>
chip_gen: v6e
topology: v6e:2x2x1
jax: 0.10.0
libtpu: 0.0.40
codegen_flags: <defaults>
</compile_context>

<pallas_src>
import functools
import math

import jax
import jax.numpy as jnp
from jax import lax
from jax.experimental import pallas as pl
from jax.experimental.pallas import tpu as pltpu


def mhsa_kernel(x_ref, wqkv_ref, wo_ref, o_ref, acc_ref, *, d_k, scale):
    h = pl.program_id(1)

    @pl.when(h == 0)
    def _init():
        acc_ref[...] = jnp.zeros_like(acc_ref)

    x = x_ref[...]                     # (S, D), compute dtype (f32 or bf16)
    cdt = x.dtype

    # Fused per-head projection: one lane-dense matmul -> [Q_h | K_h | V_h].
    qkv = jnp.dot(x, wqkv_ref[...], preferred_element_type=jnp.float32)  # (S, 3*d_k) f32
    q = (qkv[:, :d_k] * scale).astype(cdt)      # scale Q, not the (S, S) scores
    k = qkv[:, d_k:2 * d_k].astype(cdt)
    v = qkv[:, 2 * d_k:].astype(cdt)

    # scores = Q @ K^T (contract on d_k, no explicit transpose materialized).
    scores = lax.dot_general(q, k, (((1,), (1,)), ((), ())),
                             preferred_element_type=jnp.float32)         # (S, S) f32

    # Softmax over keys, kept in f32 (max-subtracted for stability).
    m = jnp.max(scores, axis=-1, keepdims=True)
    p = jnp.exp(scores - m)
    denom = jnp.sum(p, axis=-1, keepdims=True)                           # (S, 1)

    # PV matmul on unnormalised probs; normalise the (S, d_v) result once.
    head = jnp.dot(p.astype(cdt), v, preferred_element_type=jnp.float32)  # (S, d_v)
    head = head * pl.reciprocal(denom, approx=False)  # approx=True ok at looser tol

    # concat(heads) @ W_O  ==  sum_h head_h @ W_O[h]  -> accumulate in f32.
    acc_ref[...] += jnp.dot(head.astype(cdt), wo_ref[...],
                            preferred_element_type=jnp.float32)

    @pl.when(h == pl.num_programs(1) - 1)
    def _finalize():
        o_ref[...] = acc_ref[...].astype(o_ref.dtype)


def multi_head_self_attention(x, w_q, w_k, w_v, w_o):
    """x: (B, S, D); w_q/w_k/w_v: (H, D, d_k); w_o: (H*d_v, D)."""
    B, S, D = x.shape
    H, _, d_k = w_q.shape
    d_v = w_v.shape[-1]

    # Wrapper-side weight packing (layout plumbing only, outside the kernel):
    #   fused per-head QKV slab (H, D, d_k + d_k + d_v); W_O viewed per head.
    w_qkv = jnp.concatenate([w_q, w_k, w_v], axis=-1)
    wo3 = w_o.reshape(H, d_v, D)

    kernel = functools.partial(mhsa_kernel, d_k=d_k, scale=1.0 / math.sqrt(d_k))

    return pl.pallas_call(
        kernel,
        out_shape=jax.ShapeDtypeStruct((B, S, D), x.dtype),
        grid_spec=pltpu.PrefetchScalarGridSpec(
            num_scalar_prefetch=0,
            grid=(B, H),                      # batch parallel, heads accumulated
            in_specs=[
                # x: one batch row, resident across the whole head axis.
                pl.BlockSpec((pl.Squeezed(), S, D), lambda b, h: (b, 0, 0)),
                # fused QKV weights: stream one head per step.
                pl.BlockSpec((pl.Squeezed(), D, 2 * d_k + d_v),
                             lambda b, h: (h, 0, 0)),
                # W_O: one head per step.
                pl.BlockSpec((pl.Squeezed(), d_v, D), lambda b, h: (h, 0, 0)),
            ],
            out_specs=pl.BlockSpec((pl.Squeezed(), S, D), lambda b, h: (b, 0, 0)),
            scratch_shapes=[pltpu.VMEM((S, D), jnp.float32)],  # output accumulator
        ),
        compiler_params=pltpu.CompilerParams(
            dimension_semantics=("parallel", "arbitrary"),
            # Explicit scoped-VMEM budget: headroom under v7x's 64 MiB physical,
            # above the 16/32 MiB defaults on v5e/v6e.
            vmem_limit_bytes=48 * 1024 * 1024,
        ),
    )(x, w_qkv, wo3)


def reference(x, w_q, w_k, w_v, w_o, d_k):
    """Pure-JAX reference matching the torch module semantics."""
    H = w_q.shape[0]
    head_outs = []
    for i in range(H):
        Q = x @ w_q[i]
        K = x @ w_k[i]
        V = x @ w_v[i]
        s = (Q @ jnp.swapaxes(K, -1, -2)) / math.sqrt(d_k)
        p = jax.nn.softmax(s, axis=-1)
        head_outs.append(p @ V)
    cat = jnp.concatenate(head_outs, axis=-1)
    return cat @ w_o


if __name__ == "__main__":
    B, S, d_model, n_heads = 2, 8, 32, 8
    d_k = d_v = d_model // n_heads
    scale = d_model ** (-0.5)

    key = jax.random.PRNGKey(0)
    kx, kq, kk, kv, ko = jax.random.split(key, 5)

    x = jax.random.normal(kx, (B, S, d_model), dtype=jnp.float32)
    w_q = scale * jax.random.normal(kq, (n_heads, d_model, d_k), dtype=jnp.float32)
    w_k = scale * jax.random.normal(kk, (n_heads, d_model, d_k), dtype=jnp.float32)
    w_v = scale * jax.random.normal(kv, (n_heads, d_model, d_v), dtype=jnp.float32)
    w_o = scale * jax.random.normal(ko, (n_heads * d_v, d_model), dtype=jnp.float32)

    out = multi_head_self_attention(x, w_q, w_k, w_v, w_o)
    out = jax.block_until_ready(out)

    ref = reference(x, w_q, w_k, w_v, w_o, d_k)
    assert out.shape == (B, S, d_model)
    assert jnp.allclose(out, ref, atol=1e-4, rtol=1e-4), "mismatch vs reference"

    print("KERNEL_OK")
</pallas_src>

<mosaic_0001>
module attributes {stable_mosaic.version = 11 : i64} {
  func.func @mhsa_kernel(%arg0: i32, %arg1: i32, %arg2: memref<1x8x32xf32, #tpu.memory_space<vmem>>, %arg3: memref<1x32x12xf32, #tpu.memory_space<vmem>>, %arg4: memref<1x4x32xf32, #tpu.memory_space<vmem>>, %arg5: memref<1x8x32xf32, #tpu.memory_space<vmem>>, %arg6: memref<8x32xf32, #tpu.memory_space<vmem>>) attributes {dimension_semantics = [#tpu.dimension_semantics<parallel>, #tpu.dimension_semantics<arbitrary>], iteration_bounds = array<i64: 2, 8>, scalar_prefetch = 0 : i64, scratch_operands = 1 : i64, tpu.core_type = #tpu.core_type<tc>, window_params = [{transform_indices = @transform_0, window_bounds = array<i64: 1, 8, 32>}, {transform_indices = @transform_1, window_bounds = array<i64: 1, 32, 12>}, {transform_indices = @transform_2, window_bounds = array<i64: 1, 4, 32>}, {transform_indices = @transform_3, window_bounds = array<i64: 1, 8, 32>}]} {
    %c0_i32 = arith.constant 0 : i32
    %0 = arith.cmpi eq, %arg1, %c0_i32 : i32
    %1 = arith.extui %0 : i1 to i32
    %c0_i32_0 = arith.constant 0 : i32
    %2 = arith.cmpi ne, %1, %c0_i32_0 : i32
    scf.if %2 {
      %cst_20 = arith.constant 0.000000e+00 : f32
      %34 = vector.broadcast %cst_20 : f32 to vector<8x32xf32>
      %c0_21 = arith.constant 0 : index
      %c0_22 = arith.constant 0 : index
      %35 = vector.load %arg6[%c0_21, %c0_22] : memref<8x32xf32, #tpu.memory_space<vmem>>, vector<8x32xf32>
      tpu.vector_store %arg6[%c0_21, %c0_22], %34 {strides = array<i32>} : memref<8x32xf32, #tpu.memory_space<vmem>>, vector<8x32xf32>,
    } else {
    }
    %c0 = arith.constant 0 : index
    %c0_1 = arith.constant 0 : index
    %c0_2 = arith.constant 0 : index
    %3 = vector.load %arg2[%c0, %c0_1, %c0_2] : memref<1x8x32xf32, #tpu.memory_space<vmem>>, vector<1x8x32xf32>
    %4 = vector.shape_cast %3 : vector<1x8x32xf32> to vector<8x32xf32>
    %c0_3 = arith.constant 0 : index
    %c0_4 = arith.constant 0 : index
    %c0_5 = arith.constant 0 : index
    %5 = vector.load %arg3[%c0_3, %c0_4, %c0_5] : memref<1x32x12xf32, #tpu.memory_space<vmem>>, vector<1x32x12xf32>
    %6 = vector.shape_cast %5 : vector<1x32x12xf32> to vector<32x12xf32>
    %cst = arith.constant dense<0.000000e+00> : vector<8x12xf32>
    %7 = tpu.matmul %4, %6, %cst {dimension_numbers = #tpu.dot_dimension_numbers<[1], [0], [0], [1], [0, 0, 1, 1], [], []>} : vector<8x32xf32>, vector<32x12xf32>, vector<8x12xf32> -> vector<8x12xf32>
    %8 = vector.extract_strided_slice %7 {offsets = [0, 0], sizes = [8, 4], strides = [1, 1]} : vector<8x12xf32> to vector<8x4xf32>
    %cst_6 = arith.constant 5.000000e-01 : f32
    %9 = vector.broadcast %cst_6 : f32 to vector<8x4xf32>
    %10 = arith.mulf %8, %9 : vector<8x4xf32>
    %11 = vector.extract_strided_slice %7 {offsets = [0, 4], sizes = [8, 4], strides = [1, 1]} : vector<8x12xf32> to vector<8x4xf32>
    %12 = vector.extract_strided_slice %7 {offsets = [0, 8], sizes = [8, 4], strides = [1, 1]} : vector<8x12xf32> to vector<8x4xf32>
    %cst_7 = arith.constant dense<0.000000e+00> : vector<8x8xf32>
    %13 = tpu.matmul %10, %11, %cst_7 {dimension_numbers = #tpu.dot_dimension_numbers<[1], [1], [0], [0], [0, 0, 1, 0], [], []>} : vector<8x4xf32>, vector<8x4xf32>, vector<8x8xf32> -> vector<8x8xf32>
    %cst_8 = arith.constant dense<0xFF800000> : vector<8xf32>
    %14 = vector.multi_reduction <maximumf>, %13, %cst_8 [1] : vector<8x8xf32> to vector<8xf32>
    %15 = vector.shape_cast %14 : vector<8xf32> to vector<8x1xf32>
    %16 = vector.broadcast %15 : vector<8x1xf32> to vector<8x8xf32>
    %17 = arith.subf %13, %16 : vector<8x8xf32>
    %18 = math.exp %17 : vector<8x8xf32>
    %cst_9 = arith.constant dense<0.000000e+00> : vector<8xf32>
    %19 = vector.multi_reduction <add>, %18, %cst_9 [1] : vector<8x8xf32> to vector<8xf32>
    %20 = vector.shape_cast %19 : vector<8xf32> to vector<8x1xf32>
    %cst_10 = arith.constant dense<0.000000e+00> : vector<8x4xf32>
    %21 = tpu.matmul %18, %12, %cst_10 {dimension_numbers = #tpu.dot_dimension_numbers<[1], [0], [0], [1], [0, 0, 1, 1], [], []>} : vector<8x8xf32>, vector<8x4xf32>, vector<8x4xf32> -> vector<8x4xf32>
    %22 = tpu.reciprocal %20 : vector<8x1xf32> -> vector<8x1xf32>
    %23 = vector.broadcast %22 : vector<8x1xf32> to vector<8x4xf32>
    %24 = arith.mulf %21, %23 : vector<8x4xf32>
    %c0_11 = arith.constant 0 : index
    %c0_12 = arith.constant 0 : index
    %25 = vector.load %arg6[%c0_11, %c0_12] : memref<8x32xf32, #tpu.memory_space<vmem>>, vector<8x32xf32>
    %c0_13 = arith.constant 0 : index
    %c0_14 = arith.constant 0 : index
    %c0_15 = arith.constant 0 : index
    %26 = vector.load %arg4[%c0_13, %c0_14, %c0_15] : memref<1x4x32xf32, #tpu.memory_space<vmem>>, vector<1x4x32xf32>
    %27 = vector.shape_cast %26 : vector<1x4x32xf32> to vector<4x32xf32>
    %cst_16 = arith.constant dense<0.000000e+00> : vector<8x32xf32>
    %28 = tpu.matmul %24, %27, %cst_16 {dimension_numbers = #tpu.dot_dimension_numbers<[1], [0], [0], [1], [0, 0, 1, 1], [], []>} : vector<8x4xf32>, vector<4x32xf32>, vector<8x32xf32> -> vector<8x32xf32>
    %29 = arith.addf %25, %28 : vector<8x32xf32>
    %c0_17 = arith.constant 0 : index
    %c0_18 = arith.constant 0 : index
    %30 = vector.load %arg6[%c0_17, %c0_18] : memref<8x32xf32, #tpu.memory_space<vmem>>, vector<8x32xf32>
    tpu.vector_store %arg6[%c0_17, %c0_18], %29 {strides = array<i32>} : memref<8x32xf32, #tpu.memory_space<vmem>>, vector<8x32xf32>,
    %c7_i32 = arith.constant 7 : i32
    %31 = arith.cmpi eq, %arg1, %c7_i32 : i32
    %32 = arith.extui %31 : i1 to i32
    %c0_i32_19 = arith.constant 0 : i32
    %33 = arith.cmpi ne, %32, %c0_i32_19 : i32
    scf.if %33 {
      %c0_20 = arith.constant 0 : index
      %c0_21 = arith.constant 0 : index
      %34 = vector.load %arg6[%c0_20, %c0_21] : memref<8x32xf32, #tpu.memory_space<vmem>>, vector<8x32xf32>
      %c0_22 = arith.constant 0 : index
      %c0_23 = arith.constant 0 : index
      %c0_24 = arith.constant 0 : index
      %35 = vector.load %arg5[%c0_22, %c0_23, %c0_24] : memref<1x8x32xf32, #tpu.memory_space<vmem>>, vector<1x8x32xf32>
      %36 = vector.shape_cast %35 : vector<1x8x32xf32> to vector<8x32xf32>
      %37 = vector.shape_cast %34 : vector<8x32xf32> to vector<1x8x32xf32>
      tpu.vector_store %arg5[%c0_22, %c0_23, %c0_24], %37 {strides = array<i32>} : memref<1x8x32xf32, #tpu.memory_space<vmem>>, vector<1x8x32xf32>,
    } else {
    }
    return
  }
  func.func @transform_0(%arg0: i32, %arg1: i32) -> (i32, i32, i32) {
    %c0_i32 = arith.constant 0 : i32
    %c0_i32_0 = arith.constant 0 : i32
    %c0_i32_1 = arith.constant 0 : i32
    return %arg0, %c0_i32, %c0_i32_0 : i32, i32, i32
  }
  func.func @transform_1(%arg0: i32, %arg1: i32) -> (i32, i32, i32) {
    %c0_i32 = arith.constant 0 : i32
    %c0_i32_0 = arith.constant 0 : i32
    %c0_i32_1 = arith.constant 0 : i32
    return %arg1, %c0_i32, %c0_i32_0 : i32, i32, i32
  }
  func.func @transform_2(%arg0: i32, %arg1: i32) -> (i32, i32, i32) {
    %c0_i32 = arith.constant 0 : i32
    %c0_i32_0 = arith.constant 0 : i32
    %c0_i32_1 = arith.constant 0 : i32
    return %arg1, %c0_i32, %c0_i32_0 : i32, i32, i32
  }
  func.func @transform_3(%arg0: i32, %arg1: i32) -> (i32, i32, i32) {
    %c0_i32 = arith.constant 0 : i32
    %c0_i32_0 = arith.constant 0 : i32
    %c0_i32_1 = arith.constant 0 : i32
    return %arg0, %c0_i32, %c0_i32_0 : i32, i32, i32
  }
}

</mosaic_0001>

<llo_original>
// kernel: tpu_custom_call.1
$region0: #{tpu_custom_call.1}
  #allocation0 [shape = 'u32[]', space=smem, size = 0x4, offset = 0x4, fixed_abs, tag = 'smem constant byte address 0x4 - core index']
  #allocation1 [shape = 'u32[144,128]{1,0:T(1,128)}', space=vmem, size = 0x12000, scoped, tag = 'internal scratch']
  #allocation2 [shape = 'f32[8,32]{1,0:T(8,128)}', space=vmem, size = 0x1000, scoped, tag = 'scratch operand']
  %s0 = inlined_call_operand.vmem [shape: f32[2,8,32], index: 0, kind: input, shape index: {}]
  %s1 = inlined_call_operand.vmem [shape: f32[8,32,12], index: 1, kind: input, shape index: {}]
  %s2 = inlined_call_operand.vmem [shape: f32[8,4,32], index: 2, kind: input, shape index: {}]
  %s3 = inlined_call_operand.hbm [shape: f32[2,8,32], index: 3, kind: output, shape index: {}]
  %s4 = sld [smem:[#allocation0]]
  $region53: #{tpu_custom_call.1} parent=0
    _
  %s6 = ssub.s32 1, %s4
  %s7 = scalar_select 0, %s6, %s4
  $region1: #{tpu_custom_call.1} parent=0
    #allocation3 [shape = 'u8[8192]{0}', space=vmem, size = 0x2000, scoped, tag = 'output window, operand 0']
    #allocation4 [shape = 's32[2]{0}', space=sflag, size = 0x8, scoped, tag = 'scoped memory for tpu_custom_call.1']
    %8 = vsyncpa [#allocation4], 0
    %s9 = scalar_lea.sflag [#allocation4], 1
    %10 = vsyncpa %s9, 0
    loop: start=0, step=1, limit=18
    $region2: #{tpu_custom_call.1} parent=1 // loop_pre_header
      _
    $region3: #{tpu_custom_call.1} parent=1 // loop_header
      %s12 = sphi 0, %s16
      %p13 = scmp.ge.s32.totalorder %s12, 18
      %s19 = sphi 0, %s31
      %s20 = sphi 0, %s27
      %s21 = sphi 0, %s19
      %s22 = sphi 0, %s20
      %s23 = sphi 0, %s21
      %s24 = sphi 0, %s22
      %s34 = sphi 0, %s36
      %s37 = sphi 0, %s34
      %s38 = sphi 0, %s37
      %s54 = sphi 0, %s38
      %s60 = sphi 0, %s62
      %s63 = sphi 0, %s60
      %s64 = sphi 0, %s63
      %s80 = sphi 0, %s64
      %s86 = sphi 0, %s88
      %s89 = sphi 0, %s86
      %s90 = sphi 0, %s89
      %s106 = sphi 0, %s90
      %s112 = sphi 0, %s114
      %s115 = sphi 0, %s112
      %s116 = sphi 0, %s115
      %s132 = sphi 0, %s116
    $region4: #{tpu_custom_call.1} parent=1 // loop_header_branch
      %15 = sbr.rel (%p13) target = $region8
    $region5: #{tpu_custom_call.1} parent=1 // loop_body
      %s17 = ssub.s32 %s12, 1
      %s18 = ssub.s32 %s12, 2
      %s25 = sadd.s32 1, %s20
      %p26 = scmp.ge.s32.totalorder %s25, 8
      %s27 = scalar_select %p26, 0, %s25
      %s28 = sadd.s32 1, %s19
      %s29 = scalar_select %p26, %s28, %s19
      %p30 = scmp.ge.s32.totalorder %s29, 2
      %s31 = scalar_select %p30, 0, %s29
      %s32 = ssub.s32 %s19, %s31
      %p33 = scmp.eq.s32.totalorder %s32, 0
      %s35 = sadd.s32 %s34, 1
      %s36 = scalar_select %p33, %s34, %s35
      %p39 = pneg %p33
      %p40 = scmp.eq.s32.totalorder %s12, 15
      %p41 = por %p39, %p40
      %p42 = scmp.ne.s32.totalorder %s34, %s37
      %p43 = scmp.eq.s32.totalorder %s12, 0
      %p44 = por %p42, %p43
      %p45 = scmp.ne.s32.totalorder %s34, %s37
      %p46 = scmp.eq.s32.totalorder %s17, 15
      %p47 = por %p45, %p46
      %p48 = scmp.ne.s32.totalorder %s37, %s38
      %p49 = scmp.eq.s32.totalorder %s17, 0
      %p50 = por %p48, %p49
      %p51 = scmp.ne.s32.totalorder %s37, %s38
      %p52 = scmp.eq.s32.totalorder %s18, 15
      %p53 = por %p51, %p52
      %p55 = scmp.ne.s32.totalorder %s38, %s54
      %p56 = scmp.eq.s32.totalorder %s18, 0
      %p57 = por %p55, %p56
      %s58 = ssub.s32 %s20, %s27
      %p59 = scmp.eq.s32.totalorder %s58, 0
      %s61 = sadd.s32 %s60, 1
      %s62 = scalar_select %p59, %s60, %s61
      %p65 = pneg %p59
      %p66 = scmp.eq.s32.totalorder %s12, 15
      %p67 = por %p65, %p66
      %p68 = scmp.ne.s32.totalorder %s60, %s63
      %p69 = scmp.eq.s32.totalorder %s12, 0
      %p70 = por %p68, %p69
      %p71 = scmp.ne.s32.totalorder %s60, %s63
      %p72 = scmp.eq.s32.totalorder %s17, 15
      %p73 = por %p71, %p72
      %p74 = scmp.ne.s32.totalorder %s63, %s64
      %p75 = scmp.eq.s32.totalorder %s17, 0
      %p76 = por %p74, %p75
      %p77 = scmp.ne.s32.totalorder %s63, %s64
      %p78 = scmp.eq.s32.totalorder %s18, 15
      %p79 = por %p77, %p78
      %p81 = scmp.ne.s32.totalorder %s64, %s80
      %p82 = scmp.eq.s32.totalorder %s18, 0
      %p83 = por %p81, %p82
      %s84 = ssub.s32 %s20, %s27
      %p85 = scmp.eq.s32.totalorder %s84, 0
      %s87 = sadd.s32 %s86, 1
      %s88 = scalar_select %p85, %s86, %s87
      %p91 = pneg %p85
      %p92 = scmp.eq.s32.totalorder %s12, 15
      %p93 = por %p91, %p92
      %p94 = scmp.ne.s32.totalorder %s86, %s89
      %p95 = scmp.eq.s32.totalorder %s12, 0
      %p96 = por %p94, %p95
      %p97 = scmp.ne.s32.totalorder %s86, %s89
      %p98 = scmp.eq.s32.totalorder %s17, 15
      %p99 = por %p97, %p98
      %p100 = scmp.ne.s32.totalorder %s89, %s90
      %p101 = scmp.eq.s32.totalorder %s17, 0
      %p102 = por %p100, %p101
      %p103 = scmp.ne.s32.totalorder %s89, %s90
      %p104 = scmp.eq.s32.totalorder %s18, 15
      %p105 = por %p103, %p104
      %p107 = scmp.ne.s32.totalorder %s90, %s106
      %p108 = scmp.eq.s32.totalorder %s18, 0
      %p109 = por %p107, %p108
      %s110 = ssub.s32 %s19, %s31
      %p111 = scmp.eq.s32.totalorder %s110, 0
      %s113 = sadd.s32 %s112, 1
      %s114 = scalar_select %p111, %s112, %s113
      %p117 = pneg %p111
      %p118 = scmp.eq.s32.totalorder %s12, 15
      %p119 = por %p117, %p118
      %p120 = scmp.ne.s32.totalorder %s112, %s115
      %p121 = scmp.eq.s32.totalorder %s12, 0
      %p122 = por %p120, %p121
      %p123 = scmp.ne.s32.totalorder %s112, %s115
      %p124 = scmp.eq.s32.totalorder %s17, 15
      %p125 = por %p123, %p124
      %p126 = scmp.ne.s32.totalorder %s115, %s116
      %p127 = scmp.eq.s32.totalorder %s17, 0
      %p128 = por %p126, %p127
      %p129 = scmp.ne.s32.totalorder %s115, %s116
      %p130 = scmp.eq.s32.totalorder %s18, 15
      %p131 = por %p129, %p130
      %p133 = scmp.ne.s32.totalorder %s116, %s132
      %p134 = scmp.eq.s32.totalorder %s18, 0
      %p135 = por %p133, %p134
      %p136 = scmp.le.s32.totalorder 1, %s12
      %p137 = scmp.lt.s32.totalorder %s12, 17
      %p138 = pnand %p136, %p137
      %p139 = pneg %p138
      // Predicated region
      $region9: #{tpu_custom_call.1} parent=5 // pred_check
        _
      $region10: #{tpu_custom_call.1} parent=5 // pred_check_branch
        %141 = sbr.rel (%p138) target = $region12
      $region11: #{tpu_custom_call.1} parent=5 // pred_region
        %s142 = ssub.s32 %s12, 1
      $region12: #{tpu_custom_call.1} parent=5 // pred_fallthru
        _
      %p143 = scmp.lt.s32.totalorder %s12, 16
      // Predicated region
      $region13: #{tpu_custom_call.1} parent=5 // pred_check
        %p144 = pneg %p143
      $region14: #{tpu_custom_call.1} parent=5 // pred_check_branch
        %146 = sbr.rel (%p144) target = $region16
      $region15: #{tpu_custom_call.1} parent=5 // pred_region
        // Predicated region
        $region17: #{tpu_custom_call.1} parent=15 // pred_check
          %p147 = pneg %p44
        $region18: #{tpu_custom_call.1} parent=15 // pred_check_branch
          %149 = sbr.rel (%p147) target = $region20
        $region19: #{tpu_custom_call.1} parent=15 // pred_region
          %p150 = scmp.lt.s32.totalorder %s19, 1
          %s151 = scalar_select %p150, %s19, 1
          %s152 = smul.addr %s151, 8
          %s153 = scalar_lea.vmem %s0, %s152
        $region20: #{tpu_custom_call.1} parent=15 // pred_fallthru
          _
        // Predicated region
        $region21: #{tpu_custom_call.1} parent=15 // pred_check
          %p154 = pneg %p70
        $region22: #{tpu_custom_call.1} parent=15 // pred_check_branch
          %156 = sbr.rel (%p154) target = $region24
        $region23: #{tpu_custom_call.1} parent=15 // pred_region
          %p157 = scmp.lt.s32.totalorder %s20, 7
          %s158 = scalar_select %p157, %s20, 7
          %s159 = smul.addr %s158, 4
          %s160 = smul.addr %s159, 8
          %s161 = scalar_lea.vmem %s1, %s160
        $region24: #{tpu_custom_call.1} parent=15 // pred_fallthru
          _
        // Predicated region
        $region25: #{tpu_custom_call.1} parent=15 // pred_check
          %p162 = pneg %p96
        $region26: #{tpu_custom_call.1} parent=15 // pred_check_branch
          %164 = sbr.rel (%p162) target = $region28
        $region27: #{tpu_custom_call.1} parent=15 // pred_region
          %p165 = scmp.lt.s32.totalorder %s20, 7
          %s166 = scalar_select %p165, %s20, 7
          %s167 = smul.addr %s166, 4
          %s168 = scalar_lea.vmem %s2, %s167
        $region28: #{tpu_custom_call.1} parent=15 // pred_fallthru
          _
      $region16: #{tpu_custom_call.1} parent=5 // pred_fallthru
        _
      %p169 = scmp.le.s32.totalorder 1, %s12
      %p170 = scmp.lt.s32.totalorder %s12, 17
      %p171 = pnand %p169, %p170
      %p172 = pneg %p171
      // Predicated region
      $region29: #{tpu_custom_call.1} parent=5 // pred_check
        _
      $region30: #{tpu_custom_call.1} parent=5 // pred_check_branch
        %174 = sbr.rel (%p171) target = $region32
      $region31: #{tpu_custom_call.1} parent=5 // pred_region
        %s175 = ssub.s32 %s12, 1
        %p176 = scmp.lt.s32.totalorder %s21, 1
        %s177 = scalar_select %p176, %s21, 1
        %s178 = smul.addr %s177, 8
        %s179 = scalar_lea.vmem %s0, %s178
        %p180 = pneg %p50
        %p181 = pneg %p47
        %p182 = scmp.lt.s32.totalorder %s22, 7
        %s183 = scalar_select %p182, %s22, 7
        %s184 = smul.addr %s183, 4
        %s185 = smul.addr %s184, 8
        %s186 = scalar_lea.vmem %s1, %s185
        %p187 = pneg %p76
        %p188 = pneg %p73
        %p189 = scmp.lt.s32.totalorder %s22, 7
        %s190 = scalar_select %p189, %s22, 7
        %s191 = smul.addr %s190, 4
        %s192 = scalar_lea.vmem %s2, %s191
        %p193 = pneg %p102
        %p194 = pneg %p99
        %p195 = pneg %p128
        %p196 = pneg %p125
        %s197 = sand.u32 %s115, 1
        %s198 = scalar_lea.sflag [#allocation4], %s197
        %s199 = sand.u32 %s115, 1
        %s200 = smul.addr %s199, 8
        %s201 = scalar_lea.vmem [#allocation3], %s200
        %p202 = scmp.lt.s32.totalorder %s21, 1
        %s203 = scalar_select %p202, %s21, 1
        %s204 = smul.addr %s203, 8
        %s205 = scalar_lea.vmem %s0, %s204
        %p206 = scmp.lt.s32.totalorder %s22, 7
        %s207 = scalar_select %p206, %s22, 7
        %s208 = smul.addr %s207, 4
        %s209 = smul.addr %s208, 8
        %s210 = scalar_lea.vmem %s1, %s209
        %p211 = scmp.lt.s32.totalorder %s22, 7
        %s212 = scalar_select %p211, %s22, 7
        %s213 = smul.addr %s212, 4
        %s214 = scalar_lea.vmem %s2, %s213
        %p215 = scmp.eq.s32.totalorder %s22, 0
        // Predicated region
        $region33: #{tpu_custom_call.1} parent=31 // pred_check
          %p216 = pneg %p215
        $region34: #{tpu_custom_call.1} parent=31 // pred_check_branch
          %218 = sbr.rel (%p216) target = $region36
        $region35: #{tpu_custom_call.1} parent=31 // pred_region
          %vm219 = vcmask 261120
          %220 = vst.msk [vmem:[#allocation2] sm:$0xff] %vm219, 0.0
        $region36: #{tpu_custom_call.1} parent=31 // pred_fallthru
          _
        %v221 = vld [vmem:[%s205] sm:$0xff]
        %v222 = vld [vmem:[%s210] sm:$0xff]
        %v223 = vld [vmem:[%s210 + $0x8] sm:$0xff]
        %v224 = vld [vmem:[%s210 + $0x10] sm:$0xff]
        %v225 = vld [vmem:[%s210 + $0x18] sm:$0xff]
        %vm226 = vcmask 261120
        %v228 = vsel %vm226, %v221, 0
        %230 = vmatprep.subr.mxu0 0.0
        %231 = vmatpush1.msra.mxu0 0.0
        %232 = vmatprep.subr.mxu0 0.0
        %233 = vmatpush1.msra.mxu0 0.0
        %234 = vmatprep.subr.mxu0 0.0
        %235 = vmatpush1.msra.mxu0 0.0
        %236 = vmatprep.subr.mxu0 0.0
        %237 = vmatpush1.msra.mxu0 0.0
        %238 = vmatprep.subr.mxu0 0.0
        %239 = vmatpush1.msra.mxu0 0.0
        %240 = vmatprep.subr.mxu0 0.0
        %241 = vmatpush1.msra.mxu0 0.0
        %242 = vmatprep.subr.mxu0 0.0
        %243 = vmatpush1.msra.mxu0 0.0
        %244 = vmatprep.subr.mxu0 0.0
        %245 = vmatpush1.msra.mxu0 0.0
        %246 = vmatprep.subr.mxu0 0.0
        %247 = vmatpush1.msra.mxu0 0.0
        %248 = vmatprep.subr.mxu0 0.0
        %249 = vmatpush1.msra.mxu0 0.0
        %250 = vmatprep.subr.mxu0 0.0
        %251 = vmatpush1.msra.mxu0 0.0
        %252 = vmatprep.subr.mxu0 0.0
        %253 = vmatpush1.msra.mxu0 0.0
        %254 = vmatprep.subr.mxu0 0.0
        %255 = vmatpush1.msra.mxu0 %v225
        %256 = vmatprep.subr.mxu0 0.0
        %257 = vmatpush1.msra.mxu0 %v224
        %258 = vmatprep.subr.mxu0 0.0
        %259 = vmatpush1.msra.mxu0 %v223
        %260 = vmatprep.subr.mxu0 0.0
        %261 = vmatpush1.msra.mxu0 %v222
        %262 = vmatprep.subr.mxu0 0.0
        %263 = vmatpush2.msra.mxu0 0.0
        %264 = vmatprep.subr.mxu0 0.0
        %265 = vmatpush2.msra.mxu0 0.0
        %266 = vmatprep.subr.mxu0 0.0
        %267 = vmatpush2.msra.mxu0 0.0
        %268 = vmatprep.subr.mxu0 0.0
        %269 = vmatpush2.msra.mxu0 0.0
        %270 = vmatprep.subr.mxu0 0.0
        %271 = vmatpush2.msra.mxu0 0.0
        %272 = vmatprep.subr.mxu0 0.0
        %273 = vmatpush2.msra.mxu0 0.0
        %274 = vmatprep.subr.mxu0 0.0
        %275 = vmatpush2.msra.mxu0 0.0
        %276 = vmatprep.subr.mxu0 0.0
        %277 = vmatpush2.msra.mxu0 0.0
        %278 = vmatprep.subr.mxu0 0.0
        %279 = vmatpush2.msra.mxu0 0.0
        %280 = vmatprep.subr.mxu0 0.0
        %281 = vmatpush2.msra.mxu0 0.0
        %282 = vmatprep.subr.mxu0 0.0
        %283 = vmatpush2.msra.mxu0 0.0
        %284 = vmatprep.subr.mxu0 0.0
        %285 = vmatpush2.msra.mxu0 0.0
        %286 = vmatprep.subr.mxu0 0.0
        %287 = vmatpush2.msra.mxu0 0.0
        %288 = vmatprep.subr.mxu0 0.0
        %289 = vmatpush2.msra.mxu0 0.0
        %290 = vmatprep.subr.mxu0 0.0
        %291 = vmatpush2.msra.mxu0 0.0
        %292 = vmatprep.subr.mxu0 0.0
        %293 = vmatpush2.msra.mxu0 0.0
        %294 = vmatprep.mubr.f32.mxu0 0.0
        %295 = vmatmul.mubr.f32.gmra.mxu0 %v228
        %v296 = vpop.f32.mrf.mxu0
        %v297 = vadd.f32 0.0, %v296
        %v298 = vpop.f32.mrf.mxu0
        %299 = vdwg.mxu0
        %v300 = vmul.f32 %v297, 0.5
        %302 = vrot.lane.b32.xlu0 %v297, 124
        %v303 = vpop.permute.xlu0 %302
        %vm304 = vcmask 31744
        %v306 = vsel %vm304, %v300, 0
        %v308 = vsel %vm304, %v303, 0
        %310 = vmatprep.subr.mxu0 0.0
        %311 = vmatpush1.xpose.msra.mxu0 0.0
        %312 = vmatprep.subr.mxu0 0.0
        %313 = vmatpush1.xpose.msra.mxu0 0.0
        %314 = vmatprep.subr.mxu0 0.0
        %315 = vmatpush1.xpose.msra.mxu0 0.0
        %316 = vmatprep.subr.mxu0 0.0
        %317 = vmatpush1.xpose.msra.mxu0 0.0
        %318 = vmatprep.subr.mxu0 0.0
        %319 = vmatpush1.xpose.msra.mxu0 0.0
        %320 = vmatprep.subr.mxu0 0.0
        %321 = vmatpush1.xpose.msra.mxu0 0.0
        %322 = vmatprep.subr.mxu0 0.0
        %323 = vmatpush1.xpose.msra.mxu0 0.0
        %324 = vmatprep.subr.mxu0 0.0
        %325 = vmatpush1.xpose.msra.mxu0 0.0
        %326 = vmatprep.subr.mxu0 0.0
        %327 = vmatpush1.xpose.msra.mxu0 0.0
        %328 = vmatprep.subr.mxu0 0.0
        %329 = vmatpush1.xpose.msra.mxu0 0.0
        %330 = vmatprep.subr.mxu0 0.0
        %331 = vmatpush1.xpose.msra.mxu0 0.0
        %332 = vmatprep.subr.mxu0 0.0
        %333 = vmatpush1.xpose.msra.mxu0 0.0
        %334 = vmatprep.subr.mxu0 0.0
        %335 = vmatpush1.xpose.msra.mxu0 0.0
        %336 = vmatprep.subr.mxu0 0.0
        %337 = vmatpush1.xpose.msra.mxu0 0.0
        %338 = vmatprep.subr.mxu0 0.0
        %339 = vmatpush1.xpose.msra.mxu0 0.0
        %340 = vmatprep.subr.mxu0 0.0
        %341 = vmatpush1.xpose.msra.mxu0 %v308
        %342 = vmatprep.subr.mxu0 0.0
        %343 = vmatpush2.xpose.msra.mxu0 0.0
        %344 = vmatprep.subr.mxu0 0.0
        %345 = vmatpush2.xpose.msra.mxu0 0.0
        %346 = vmatprep.subr.mxu0 0.0
        %347 = vmatpush2.xpose.msra.mxu0 0.0
        %348 = vmatprep.subr.mxu0 0.0
        %349 = vmatpush2.xpose.msra.mxu0 0.0
        %350 = vmatprep.subr.mxu0 0.0
        %351 = vmatpush2.xpose.msra.mxu0 0.0
        %352 = vmatprep.subr.mxu0 0.0
        %353 = vmatpush2.xpose.msra.mxu0 0.0
        %354 = vmatprep.subr.mxu0 0.0
        %355 = vmatpush2.xpose.msra.mxu0 0.0
        %356 = vmatprep.subr.mxu0 0.0
        %357 = vmatpush2.xpose.msra.mxu0 0.0
        %358 = vmatprep.subr.mxu0 0.0
        %359 = vmatpush2.xpose.msra.mxu0 0.0
        %360 = vmatprep.subr.mxu0 0.0
        %361 = vmatpush2.xpose.msra.mxu0 0.0
        %362 = vmatprep.subr.mxu0 0.0
        %363 = vmatpush2.xpose.msra.mxu0 0.0
        %364 = vmatprep.subr.mxu0 0.0
        %365 = vmatpush2.xpose.msra.mxu0 0.0
        %366 = vmatprep.subr.mxu0 0.0
        %367 = vmatpush2.xpose.msra.mxu0 0.0
        %368 = vmatprep.subr.mxu0 0.0
        %369 = vmatpush2.xpose.msra.mxu0 0.0
        %370 = vmatprep.subr.mxu0 0.0
        %371 = vmatpush2.xpose.msra.mxu0 0.0
        %372 = vmatprep.subr.mxu0 0.0
        %373 = vmatpush2.xpose.msra.mxu0 0.0
        %374 = vmatprep.mubr.f32.mxu0 0.0
        %375 = vmatmul.mubr.f32.gmra.mxu0 %v306
        %v376 = vpop.f32.mrf.mxu0
        %v377 = vadd.f32 0.0, %v376
        %v378 = vpop.f32.mrf.mxu0
        %379 = vdwg.mxu0
        %vm380 = vcmask 64512
        %v381 = vsel %vm380, %v377, -inf
        %382 = vmax.xlane.f32.xlu0 %v381
        %v383 = vpop.xlane.xlu0 %382
        %v384 = vsub.f32 %v377, %v383
        %v385 = vmul.f32 %v384, 1.442695
        %v386 = vpow.pop %v385
        %v387 = vsel %vm380, %v386, 0.0
        %388 = vadd.xlane.f32.xlu0 %v387
        %v389 = vpop.xlane.xlu0 %388
        %390 = vrot.lane.b32.xlu0 %v297, 120
        %v391 = vpop.permute.xlu0 %390
        %v394 = vsel %vm380, %v386, 0
        %396 = vmatprep.subr.mxu0 0.0
        %397 = vmatpush1.msra.mxu0 0.0
        %398 = vmatprep.subr.mxu0 0.0
        %399 = vmatpush1.msra.mxu0 0.0
        %400 = vmatprep.subr.mxu0 0.0
        %401 = vmatpush1.msra.mxu0 0.0
        %402 = vmatprep.subr.mxu0 0.0
        %403 = vmatpush1.msra.mxu0 0.0
        %404 = vmatprep.subr.mxu0 0.0
        %405 = vmatpush1.msra.mxu0 0.0
        %406 = vmatprep.subr.mxu0 0.0
        %407 = vmatpush1.msra.mxu0 0.0
        %408 = vmatprep.subr.mxu0 0.0
        %409 = vmatpush1.msra.mxu0 0.0
        %410 = vmatprep.subr.mxu0 0.0
        %411 = vmatpush1.msra.mxu0 0.0
        %412 = vmatprep.subr.mxu0 0.0
        %413 = vmatpush1.msra.mxu0 0.0
        %414 = vmatprep.subr.mxu0 0.0
        %415 = vmatpush1.msra.mxu0 0.0
        %416 = vmatprep.subr.mxu0 0.0
        %417 = vmatpush1.msra.mxu0 0.0
        %418 = vmatprep.subr.mxu0 0.0
        %419 = vmatpush1.msra.mxu0 0.0
        %420 = vmatprep.subr.mxu0 0.0
        %421 = vmatpush1.msra.mxu0 0.0
        %422 = vmatprep.subr.mxu0 0.0
        %423 = vmatpush1.msra.mxu0 0.0
        %424 = vmatprep.subr.mxu0 0.0
        %425 = vmatpush1.msra.mxu0 0.0
        %426 = vmatprep.subr.mxu0 0.0
        %427 = vmatpush1.msra.mxu0 %v391
        %428 = vmatprep.subr.mxu0 0.0
        %429 = vmatpush2.msra.mxu0 0.0
        %430 = vmatprep.subr.mxu0 0.0
        %431 = vmatpush2.msra.mxu0 0.0
        %432 = vmatprep.subr.mxu0 0.0
        %433 = vmatpush2.msra.mxu0 0.0
        %434 = vmatprep.subr.mxu0 0.0
        %435 = vmatpush2.msra.mxu0 0.0
        %436 = vmatprep.subr.mxu0 0.0
        %437 = vmatpush2.msra.mxu0 0.0
        %438 = vmatprep.subr.mxu0 0.0
        %439 = vmatpush2.msra.mxu0 0.0
        %440 = vmatprep.subr.mxu0 0.0
        %441 = vmatpush2.msra.mxu0 0.0
        %442 = vmatprep.subr.mxu0 0.0
        %443 = vmatpush2.msra.mxu0 0.0
        %444 = vmatprep.subr.mxu0 0.0
        %445 = vmatpush2.msra.mxu0 0.0
        %446 = vmatprep.subr.mxu0 0.0
        %447 = vmatpush2.msra.mxu0 0.0
        %448 = vmatprep.subr.mxu0 0.0
        %449 = vmatpush2.msra.mxu0 0.0
        %450 = vmatprep.subr.mxu0 0.0
        %451 = vmatpush2.msra.mxu0 0.0
        %452 = vmatprep.subr.mxu0 0.0
        %453 = vmatpush2.msra.mxu0 0.0
        %454 = vmatprep.subr.mxu0 0.0
        %455 = vmatpush2.msra.mxu0 0.0
        %456 = vmatprep.subr.mxu0 0.0
        %457 = vmatpush2.msra.mxu0 0.0
        %458 = vmatprep.subr.mxu0 0.0
        %459 = vmatpush2.msra.mxu0 0.0
        %460 = vmatprep.mubr.f32.mxu0 0.0
        %461 = vmatmul.mubr.f32.gmra.mxu0 %v394
        %v462 = vpop.f32.mrf.mxu0
        %v463 = vadd.f32 0.0, %v462
        %v464 = vpop.f32.mrf.mxu0
        %465 = vdwg.mxu0
        %v466 = vrcp.pop %v389
        %v467 = vmul.f32 %v463, %v466
        %v468 = vld [vmem:[#allocation2] sm:$0xff]
        %v469 = vld [vmem:[%s214] sm:$0xf]
        %v471 = vsel %vm304, %v467, 0
        %vm473 = vcmask 1043456
        %v475 = vsel %vm473, %v469, 0
        %477 = vmatprep.subr.mxu0 0.0
        %478 = vmatpush1.msra.mxu0 0.0
        %479 = vmatprep.subr.mxu0 0.0
        %480 = vmatpush1.msra.mxu0 0.0
        %481 = vmatprep.subr.mxu0 0.0
        %482 = vmatpush1.msra.mxu0 0.0
        %483 = vmatprep.subr.mxu0 0.0
        %484 = vmatpush1.msra.mxu0 0.0
        %485 = vmatprep.subr.mxu0 0.0
        %486 = vmatpush1.msra.mxu0 0.0
        %487 = vmatprep.subr.mxu0 0.0
        %488 = vmatpush1.msra.mxu0 0.0
        %489 = vmatprep.subr.mxu0 0.0
        %490 = vmatpush1.msra.mxu0 0.0
        %491 = vmatprep.subr.mxu0 0.0
        %492 = vmatpush1.msra.mxu0 0.0
        %493 = vmatprep.subr.mxu0 0.0
        %494 = vmatpush1.msra.mxu0 0.0
        %495 = vmatprep.subr.mxu0 0.0
        %496 = vmatpush1.msra.mxu0 0.0
        %497 = vmatprep.subr.mxu0 0.0
        %498 = vmatpush1.msra.mxu0 0.0
        %499 = vmatprep.subr.mxu0 0.0
        %500 = vmatpush1.msra.mxu0 0.0
        %501 = vmatprep.subr.mxu0 0.0
        %502 = vmatpush1.msra.mxu0 0.0
        %503 = vmatprep.subr.mxu0 0.0
        %504 = vmatpush1.msra.mxu0 0.0
        %505 = vmatprep.subr.mxu0 0.0
        %506 = vmatpush1.msra.mxu0 0.0
        %507 = vmatprep.subr.mxu0 0.0
        %508 = vmatpush1.msra.mxu0 %v475
        %509 = vmatprep.subr.mxu0 0.0
        %510 = vmatpush2.msra.mxu0 0.0
        %511 = vmatprep.subr.mxu0 0.0
        %512 = vmatpush2.msra.mxu0 0.0
        %513 = vmatprep.subr.mxu0 0.0
        %514 = vmatpush2.msra.mxu0 0.0
        %515 = vmatprep.subr.mxu0 0.0
        %516 = vmatpush2.msra.mxu0 0.0
        %517 = vmatprep.subr.mxu0 0.0
        %518 = vmatpush2.msra.mxu0 0.0
        %519 = vmatprep.subr.mxu0 0.0
        %520 = vmatpush2.msra.mxu0 0.0
        %521 = vmatprep.subr.mxu0 0.0
        %522 = vmatpush2.msra.mxu0 0.0
        %523 = vmatprep.subr.mxu0 0.0
        %524 = vmatpush2.msra.mxu0 0.0
        %525 = vmatprep.subr.mxu0 0.0
        %526 = vmatpush2.msra.mxu0 0.0
        %527 = vmatprep.subr.mxu0 0.0
        %528 = vmatpush2.msra.mxu0 0.0
        %529 = vmatprep.subr.mxu0 0.0
        %530 = vmatpush2.msra.mxu0 0.0
        %531 = vmatprep.subr.mxu0 0.0
        %532 = vmatpush2.msra.mxu0 0.0
        %533 = vmatprep.subr.mxu0 0.0
        %534 = vmatpush2.msra.mxu0 0.0
        %535 = vmatprep.subr.mxu0 0.0
        %536 = vmatpush2.msra.mxu0 0.0
        %537 = vmatprep.subr.mxu0 0.0
        %538 = vmatpush2.msra.mxu0 0.0
        %539 = vmatprep.subr.mxu0 0.0
        %540 = vmatpush2.msra.mxu0 0.0
        %541 = vmatprep.mubr.f32.mxu0 0.0
        %542 = vmatmul.mubr.f32.gmra.mxu0 %v471
        %v543 = vpop.f32.mrf.mxu0
        %v544 = vadd.f32 0.0, %v543
        %v545 = vpop.f32.mrf.mxu0
        %546 = vdwg.mxu0
        %v547 = vadd.f32 %v468, %v544
        %548 = vst.msk [vmem:[#allocation2] sm:$0xff] %vm226, %v547
        %p549 = scmp.eq.s32.totalorder %s22, 7
        // Predicated region
        $region37: #{tpu_custom_call.1} parent=31 // pred_check
          %p550 = pneg %p549
        $region38: #{tpu_custom_call.1} parent=31 // pred_check_branch
          %552 = sbr.rel (%p550) target = $region40
        $region39: #{tpu_custom_call.1} parent=31 // pred_region
          %v553 = vld [vmem:[#allocation2] sm:$0xff]
          %554 = vst.msk [vmem:[%s201] sm:$0xff] %vm226, %v553
        $region40: #{tpu_custom_call.1} parent=31 // pred_fallthru
          _
        %s555 = sand.u32 %s115, 1
        %s556 = scalar_lea.sflag [#allocation4], %s555
        %s557 = sand.u32 %s115, 1
        %s558 = smul.addr %s557, 8
        %s559 = scalar_lea.vmem [#allocation3], %s558
        // Predicated region
        $region41: #{tpu_custom_call.1} parent=31 // pred_check
          %p560 = pneg %p125
        $region42: #{tpu_custom_call.1} parent=31 // pred_check_branch
          %562 = sbr.rel (%p560) target = $region44
        $region43: #{tpu_custom_call.1} parent=31 // pred_region
          %s564 = ssub.s32 128, 128
          %565 = vsyncadd %s556, %s564
          %s566 = smul.addr %s21, 128
          %s567 = scalar_lea.hbm %s3, %s566
          %s569 = sshll.u32 %s559, 4
          %s570 = int_to_ptr.vmem [resolvable:$true] %s569
          %572 = dma.vmem_to_hbm [thread:$0]  %s570, 128, %s567, %s556
        $region44: #{tpu_custom_call.1} parent=31 // pred_fallthru
          _
      $region32: #{tpu_custom_call.1} parent=5 // pred_fallthru
        _
      %p573 = scmp.le.s32.totalorder 2, %s12
      // Predicated region
      $region45: #{tpu_custom_call.1} parent=5 // pred_check
        %p574 = pneg %p573
      $region46: #{tpu_custom_call.1} parent=5 // pred_check_branch
        %576 = sbr.rel (%p574) target = $region48
      $region47: #{tpu_custom_call.1} parent=5 // pred_region
        %s577 = ssub.s32 %s12, 2
        // Predicated region
        $region49: #{tpu_custom_call.1} parent=47 // pred_check
          %p578 = pneg %p131
        $region50: #{tpu_custom_call.1} parent=47 // pred_check_branch
          %580 = sbr.rel (%p578) target = $region52
        $region51: #{tpu_custom_call.1} parent=47 // pred_region
          %s581 = sand.u32 %s116, 1
          %s582 = scalar_lea.sflag [#allocation4], %s581
          %s583 = sand.u32 %s116, 1
          %s584 = smul.addr %s583, 8
          %s585 = scalar_lea.vmem [#allocation3], %s584
          %586 = dma.done %s582, 128
        $region52: #{tpu_custom_call.1} parent=47 // pred_fallthru
          _
      $region48: #{tpu_custom_call.1} parent=5 // pred_fallthru
        _
    $region6: #{tpu_custom_call.1} parent=1 // loop_footer
      %s16 = sadd.s32 1, %s12
    $region7: #{tpu_custom_call.1} parent=1 // loop_footer_branch
      %11 = sbr.rel target = $region3
    $region8: #{tpu_custom_call.1} parent=1 // loop_exit
      _
    %587 = vsyncpa [#allocation4], 1
    %s588 = scalar_lea.sflag [#allocation4], 1
    %589 = vsyncpa %s588, 1

</llo_original>
